<compile_context>
chip_gen: v5e
topology: v5e:2x2
jax: 0.10.0
libtpu: 0.0.40
codegen_flags: <defaults>
</compile_context>

<pallas_src>
import functools

import jax
import jax.numpy as jnp
import numpy as np
from jax.experimental import pallas as pl
from jax.experimental.pallas import tpu as pltpu


# --------------------------------------------------------------------------
# Wrapper-side weight refactoring (plain JAX, trace-time only)
# --------------------------------------------------------------------------
def _fuse_conv3x3(w_oihw, width):
    """OIHW 3x3 conv weight -> stack of 3 banded (width*Cin, width*Cout) matrices.

    mats[ky][(w+dx)*Cin + c, w*Cout + d] = w[d, c, ky, dx+1]   (zero when w+dx OOB),
    so the conv becomes  out = sum_ky (H-shift_{ky-1}(x_fused)) @ mats[ky].
    """
    wt = jnp.transpose(w_oihw, (2, 3, 1, 0)).astype(jnp.float32)  # (ky, kx, Ci, Co)
    mats = []
    for ky in range(3):
        m = None
        for kx in range(3):
            dx = kx - 1
            band = jnp.asarray(np.eye(width, k=-dx), jnp.float32)   # band[w+dx, w] = 1
            term = jnp.kron(band, wt[ky, kx])
            m = term if m is None else m + term
        mats.append(m)
    return jnp.stack(mats)  # (3, width*Ci, width*Co)


def _pack_params(params, W, Cin, Cout):
    """Pack b1,b2,b3,b4,gamma,beta (expanded to fused lane layout) into one (8,PW) block."""
    pw = max(W * Cin, W * Cout)

    def pad(v):
        v = v.astype(jnp.float32)
        return jnp.pad(v, (0, pw - v.shape[0]))

    rows = [
        pad(jnp.tile(params["b1"], W)),            # row 0: b1 fused  (W*Cout)
        pad(jnp.tile(params["b2"], W)),            # row 1: b2 fused  (W*Cout)
        pad(jnp.tile(params["b3"], W)),            # row 2: b3 fused  (W*Cin)
        pad(jnp.tile(params["b4"], W)),            # row 3: b4 fused  (W*Cout)
        pad(jnp.repeat(params["gamma"], Cout)),    # row 4: gamma per-W, expanded over channels
        pad(jnp.repeat(params["beta"], Cout)),     # row 5: beta
        jnp.zeros((pw,), jnp.float32),
        jnp.zeros((pw,), jnp.float32),
    ]
    return jnp.stack(rows)                         # (8, pw)


# --------------------------------------------------------------------------
# Pallas kernel: conv1 -> conv2(1x1) -> conv3 -> residual -> conv4 -> LayerNorm(W)
# --------------------------------------------------------------------------
def _res_unit_kernel(wc_in, wc_out,
                     x_ref, w1_ref, w2_ref, w3_ref, w4_ref,
                     pk_ref, sh_ref, pln_ref, o_ref):
    xf = x_ref[0]                       # (H, W*Cin)  fused lane layout
    s_up = sh_ref[0]                    # (H, H): row h -> x[h-1] (zero at border)
    s_dn = sh_ref[1]                    # (H, H): row h -> x[h+1]

    def leaky(v):
        return jnp.where(v >= 0, v, 0.1 * v)

    def dot(a, b):
        return jnp.dot(a, b, preferred_element_type=jnp.float32)

    def conv3x3(a, w_ref, bias):
        up = dot(s_up, a)
        dn = dot(s_dn, a)
        return dot(up, w_ref[0]) + dot(a, w_ref[1]) + dot(dn, w_ref[2]) + bias

    b1 = pk_ref[0:1, :wc_out]
    b2 = pk_ref[1:2, :wc_out]
    b3 = pk_ref[2:3, :wc_in]
    b4 = pk_ref[3:4, :wc_out]
    gamma = pk_ref[4:5, :wc_out]
    beta = pk_ref[5:6, :wc_out]

    y1 = leaky(conv3x3(xf, w1_ref, b1))              # (H, W*Cout)
    y2 = leaky(dot(y1, w2_ref[...]) + b2)            # (H, W*Cout)   1x1 conv
    y3 = leaky(conv3x3(y2, w3_ref, b3))              # (H, W*Cin)
    z = leaky(conv3x3(xf + y3, w4_ref, b4))          # (H, W*Cout)

    # LayerNorm over W (per row h and per channel), eps=1e-5.
    # pln = kron(ones(W,W)/W, eye(Cout)) computes the per-(h,channel) mean over W
    # and broadcasts it back across W in a single matmul.
    mu_b = dot(z, pln_ref[...])
    zc = z - mu_b
    var_b = dot(zc * zc, pln_ref[...])
    o_ref[0] = zc * jax.lax.rsqrt(var_b + 1e-5) * gamma + beta


def res_unit_forward(x_nchw, params):
    """Fused ResUnit forward (if_down_sample=False path)."""
    # TODO(synk): if_down_sample=True branch (stride-2 conv + LayerNorm(img_size//2))
    #             is not implemented; this kernel covers the default (False) path.
    N, Cin, H, W = x_nchw.shape
    Cout = params["w1"].shape[0]
    wc_in, wc_out = W * Cin, W * Cout

    # Lane-dense fused input: x_f[n, h, w*Cin + c] = x[n, c, h, w]
    xf = jnp.transpose(x_nchw, (0, 2, 3, 1)).reshape(N, H, wc_in).astype(jnp.float32)

    w1f = _fuse_conv3x3(params["w1"], W)             # (3, W*Cin,  W*Cout)
    w2f = jnp.kron(jnp.eye(W, dtype=jnp.float32),
                   params["w2"][:, :, 0, 0].T.astype(jnp.float32))   # (W*Cout, W*Cout)
    w3f = _fuse_conv3x3(params["w3"], W)             # (3, W*Cout, W*Cin)
    w4f = _fuse_conv3x3(params["w4"], W)             # (3, W*Cin,  W*Cout)
    pk = _pack_params(params, W, Cin, Cout)          # (8, max(W*Cin, W*Cout))
    sh = jnp.stack([jnp.asarray(np.eye(H, k=-1), jnp.float32),
                    jnp.asarray(np.eye(H, k=+1), jnp.float32)])      # (2, H, H)
    pln = jnp.kron(jnp.full((W, W), 1.0 / W, jnp.float32),
                   jnp.eye(Cout, dtype=jnp.float32))                 # (W*Cout, W*Cout)

    def const_spec(shape):
        nd = len(shape)
        return pl.BlockSpec(shape, lambda n, _nd=nd: (0,) * _nd)

    kernel = functools.partial(_res_unit_kernel, wc_in, wc_out)

    # TODO(synk): at production H/W/C, add an H-tiling grid axis (with halo handling)
    #             so each core sees >1 grid step and re-derive VMEM vs the 64 MiB v7x budget.
    out_f = pl.pallas_call(
        kernel,
        out_shape=jax.ShapeDtypeStruct((N, H, wc_out), jnp.float32),
        grid_spec=pltpu.PrefetchScalarGridSpec(
            num_scalar_prefetch=0,
            grid=(N,),
            in_specs=[
                pl.BlockSpec((1, H, wc_in), lambda n: (n, 0, 0)),
                const_spec(w1f.shape),
                const_spec(w2f.shape),
                const_spec(w3f.shape),
                const_spec(w4f.shape),
                const_spec(pk.shape),
                const_spec(sh.shape),
                const_spec(pln.shape),
            ],
            out_specs=pl.BlockSpec((1, H, wc_out), lambda n: (n, 0, 0)),
        ),
        compiler_params=pltpu.CompilerParams(
            dimension_semantics=("parallel",)),
    )(xf, w1f, w2f, w3f, w4f, pk, sh, pln)

    out = out_f.reshape(N, H, W, Cout)
    return jnp.transpose(out, (0, 3, 1, 2))          # back to NCHW


# ---------------- pure-JAX reference (validation only) ----------------
def res_unit_ref(x, p):
    def conv(v, w, b, pad=1):
        out = jax.lax.conv_general_dilated(
            v, w, (1, 1), ((pad, pad), (pad, pad)),
            dimension_numbers=("NCHW", "OIHW", "NCHW"))
        return out + b[None, :, None, None]

    leaky = lambda v: jnp.where(v >= 0, v, 0.1 * v)
    y = leaky(conv(x, p["w1"], p["b1"]))
    y = leaky(conv(y, p["w2"], p["b2"], pad=0))
    y = leaky(conv(y, p["w3"], p["b3"]))
    z = leaky(conv(x + y, p["w4"], p["b4"]))
    mu = z.mean(-1, keepdims=True)
    var = ((z - mu) ** 2).mean(-1, keepdims=True)
    zn = (z - mu) / jnp.sqrt(var + 1e-5)
    return zn * p["gamma"] + p["beta"]


if __name__ == "__main__":
    N, Cin, Cout, img = 2, 4, 8, 16

    key = jax.random.PRNGKey(0)
    ks = jax.random.split(key, 12)
    params = {
        "w1": 0.1 * jax.random.normal(ks[0], (Cout, Cin, 3, 3), jnp.float32),
        "b1": 0.1 * jax.random.normal(ks[1], (Cout,), jnp.float32),
        "w2": 0.1 * jax.random.normal(ks[2], (Cout, Cout, 1, 1), jnp.float32),
        "b2": 0.1 * jax.random.normal(ks[3], (Cout,), jnp.float32),
        "w3": 0.1 * jax.random.normal(ks[4], (Cin, Cout, 3, 3), jnp.float32),
        "b3": 0.1 * jax.random.normal(ks[5], (Cin,), jnp.float32),
        "w4": 0.1 * jax.random.normal(ks[6], (Cout, Cin, 3, 3), jnp.float32),
        "b4": 0.1 * jax.random.normal(ks[7], (Cout,), jnp.float32),
        "gamma": 1.0 + 0.05 * jax.random.normal(ks[8], (img,), jnp.float32),
        "beta": 0.05 * jax.random.normal(ks[9], (img,), jnp.float32),
    }
    x = jax.random.normal(ks[10], (N, Cin, img, img), jnp.float32)

    out = jax.block_until_ready(res_unit_forward(x, params))
    ref = jax.block_until_ready(res_unit_ref(x, params))
    np.testing.assert_allclose(np.asarray(out), np.asarray(ref),
                               rtol=2e-3, atol=2e-3)
    print("KERNEL_OK")
</pallas_src>

<mosaic_0001>
module attributes {stable_mosaic.version = 11 : i64} {
  func.func @_res_unit_kernel(%arg0: i32, %arg1: memref<1x16x64xf32, #tpu.memory_space<vmem>>, %arg2: memref<3x64x128xf32, #tpu.memory_space<vmem>>, %arg3: memref<128x128xf32, #tpu.memory_space<vmem>>, %arg4: memref<3x128x64xf32, #tpu.memory_space<vmem>>, %arg5: memref<3x64x128xf32, #tpu.memory_space<vmem>>, %arg6: memref<8x128xf32, #tpu.memory_space<vmem>>, %arg7: memref<2x16x16xf32, #tpu.memory_space<vmem>>, %arg8: memref<128x128xf32, #tpu.memory_space<vmem>>, %arg9: memref<1x16x128xf32, #tpu.memory_space<vmem>>) attributes {dimension_semantics = [#tpu.dimension_semantics<parallel>], iteration_bounds = array<i64: 2>, scalar_prefetch = 0 : i64, scratch_operands = 0 : i64, tpu.core_type = #tpu.core_type<tc>, window_params = [{transform_indices = @transform_0, window_bounds = array<i64: 1, 16, 64>}, {pipeline_mode = #tpu.pipeline_mode<synchronous>, transform_indices = @transform_1, window_bounds = array<i64: 3, 64, 128>}, {pipeline_mode = #tpu.pipeline_mode<synchronous>, transform_indices = @transform_2, window_bounds = array<i64: 128, 128>}, {pipeline_mode = #tpu.pipeline_mode<synchronous>, transform_indices = @transform_3, window_bounds = array<i64: 3, 128, 64>}, {pipeline_mode = #tpu.pipeline_mode<synchronous>, transform_indices = @transform_4, window_bounds = array<i64: 3, 64, 128>}, {pipeline_mode = #tpu.pipeline_mode<synchronous>, transform_indices = @transform_5, window_bounds = array<i64: 8, 128>}, {pipeline_mode = #tpu.pipeline_mode<synchronous>, transform_indices = @transform_6, window_bounds = array<i64: 2, 16, 16>}, {pipeline_mode = #tpu.pipeline_mode<synchronous>, transform_indices = @transform_7, window_bounds = array<i64: 128, 128>}, {transform_indices = @transform_8, window_bounds = array<i64: 1, 16, 128>}]} {
    %c0 = arith.constant 0 : index
    %c0_0 = arith.constant 0 : index
    %c0_1 = arith.constant 0 : index
    %0 = vector.load %arg1[%c0, %c0_0, %c0_1] : memref<1x16x64xf32, #tpu.memory_space<vmem>>, vector<1x16x64xf32>
    %1 = vector.shape_cast %0 : vector<1x16x64xf32> to vector<16x64xf32>
    %c0_2 = arith.constant 0 : index
    %c0_3 = arith.constant 0 : index
    %c0_4 = arith.constant 0 : index
    %2 = vector.load %arg7[%c0_2, %c0_3, %c0_4] : memref<2x16x16xf32, #tpu.memory_space<vmem>>, vector<1x16x16xf32>
    %3 = vector.shape_cast %2 : vector<1x16x16xf32> to vector<16x16xf32>
    %c1 = arith.constant 1 : index
    %c0_5 = arith.constant 0 : index
    %c0_6 = arith.constant 0 : index
    %4 = vector.load %arg7[%c1, %c0_5, %c0_6] : memref<2x16x16xf32, #tpu.memory_space<vmem>>, vector<1x16x16xf32>
    %5 = vector.shape_cast %4 : vector<1x16x16xf32> to vector<16x16xf32>
    %c0_7 = arith.constant 0 : index
    %c0_8 = arith.constant 0 : index
    %6 = vector.load %arg6[%c0_7, %c0_8] : memref<8x128xf32, #tpu.memory_space<vmem>>, vector<1x128xf32>
    %c1_9 = arith.constant 1 : index
    %c0_10 = arith.constant 0 : index
    %7 = vector.load %arg6[%c1_9, %c0_10] : memref<8x128xf32, #tpu.memory_space<vmem>>, vector<1x128xf32>
    %c2 = arith.constant 2 : index
    %c0_11 = arith.constant 0 : index
    %8 = vector.load %arg6[%c2, %c0_11] : memref<8x128xf32, #tpu.memory_space<vmem>>, vector<1x64xf32>
    %c3 = arith.constant 3 : index
    %c0_12 = arith.constant 0 : index
    %9 = vector.load %arg6[%c3, %c0_12] : memref<8x128xf32, #tpu.memory_space<vmem>>, vector<1x128xf32>
    %c4 = arith.constant 4 : index
    %c0_13 = arith.constant 0 : index
    %10 = vector.load %arg6[%c4, %c0_13] : memref<8x128xf32, #tpu.memory_space<vmem>>, vector<1x128xf32>
    %c5 = arith.constant 5 : index
    %c0_14 = arith.constant 0 : index
    %11 = vector.load %arg6[%c5, %c0_14] : memref<8x128xf32, #tpu.memory_space<vmem>>, vector<1x128xf32>
    %cst = arith.constant dense<0.000000e+00> : vector<16x64xf32>
    %12 = tpu.matmul %3, %1, %cst {dimension_numbers = #tpu.dot_dimension_numbers<[1], [0], [0], [1], [0, 0, 1, 1], [], []>} : vector<16x16xf32>, vector<16x64xf32>, vector<16x64xf32> -> vector<16x64xf32>
    %cst_15 = arith.constant dense<0.000000e+00> : vector<16x64xf32>
    %13 = tpu.matmul %5, %1, %cst_15 {dimension_numbers = #tpu.dot_dimension_numbers<[1], [0], [0], [1], [0, 0, 1, 1], [], []>} : vector<16x16xf32>, vector<16x64xf32>, vector<16x64xf32> -> vector<16x64xf32>
    %c0_16 = arith.constant 0 : index
    %c0_17 = arith.constant 0 : index
    %c0_18 = arith.constant 0 : index
    %14 = vector.load %arg2[%c0_16, %c0_17, %c0_18] : memref<3x64x128xf32, #tpu.memory_space<vmem>>, vector<1x64x128xf32>
    %15 = vector.shape_cast %14 : vector<1x64x128xf32> to vector<64x128xf32>
    %cst_19 = arith.constant dense<0.000000e+00> : vector<16x128xf32>
    %16 = tpu.matmul %12, %15, %cst_19 {dimension_numbers = #tpu.dot_dimension_numbers<[1], [0], [0], [1], [0, 0, 1, 1], [], []>} : vector<16x64xf32>, vector<64x128xf32>, vector<16x128xf32> -> vector<16x128xf32>
    %c1_20 = arith.constant 1 : index
    %c0_21 = arith.constant 0 : index
    %c0_22 = arith.constant 0 : index
    %17 = vector.load %arg2[%c1_20, %c0_21, %c0_22] : memref<3x64x128xf32, #tpu.memory_space<vmem>>, vector<1x64x128xf32>
    %18 = vector.shape_cast %17 : vector<1x64x128xf32> to vector<64x128xf32>
    %cst_23 = arith.constant dense<0.000000e+00> : vector<16x128xf32>
    %19 = tpu.matmul %1, %18, %cst_23 {dimension_numbers = #tpu.dot_dimension_numbers<[1], [0], [0], [1], [0, 0, 1, 1], [], []>} : vector<16x64xf32>, vector<64x128xf32>, vector<16x128xf32> -> vector<16x128xf32>
    %20 = arith.addf %16, %19 : vector<16x128xf32>
    %c2_24 = arith.constant 2 : index
    %c0_25 = arith.constant 0 : index
    %c0_26 = arith.constant 0 : index
    %21 = vector.load %arg2[%c2_24, %c0_25, %c0_26] : memref<3x64x128xf32, #tpu.memory_space<vmem>>, vector<1x64x128xf32>
    %22 = vector.shape_cast %21 : vector<1x64x128xf32> to vector<64x128xf32>
    %cst_27 = arith.constant dense<0.000000e+00> : vector<16x128xf32>
    %23 = tpu.matmul %13, %22, %cst_27 {dimension_numbers = #tpu.dot_dimension_numbers<[1], [0], [0], [1], [0, 0, 1, 1], [], []>} : vector<16x64xf32>, vector<64x128xf32>, vector<16x128xf32> -> vector<16x128xf32>
    %24 = arith.addf %20, %23 : vector<16x128xf32>
    %25 = vector.broadcast %6 : vector<1x128xf32> to vector<16x128xf32>
    %26 = arith.addf %24, %25 : vector<16x128xf32>
    %cst_28 = arith.constant 0.000000e+00 : f32
    %27 = vector.broadcast %cst_28 : f32 to vector<16x128xf32>
    %28 = arith.cmpf oge, %26, %27 : vector<16x128xf32>
    %cst_29 = arith.constant 1.000000e-01 : f32
    %29 = vector.broadcast %cst_29 : f32 to vector<16x128xf32>
    %30 = arith.mulf %29, %26 : vector<16x128xf32>
    %31 = arith.select %28, %26, %30 : vector<16x128xi1>, vector<16x128xf32>
    %c0_30 = arith.constant 0 : index
    %c0_31 = arith.constant 0 : index
    %32 = vector.load %arg3[%c0_30, %c0_31] : memref<128x128xf32, #tpu.memory_space<vmem>>, vector<128x128xf32>
    %cst_32 = arith.constant dense<0.000000e+00> : vector<16x128xf32>
    %33 = tpu.matmul %31, %32, %cst_32 {dimension_numbers = #tpu.dot_dimension_numbers<[1], [0], [0], [1], [0, 0, 1, 1], [], []>} : vector<16x128xf32>, vector<128x128xf32>, vector<16x128xf32> -> vector<16x128xf32>
    %34 = vector.broadcast %7 : vector<1x128xf32> to vector<16x128xf32>
    %35 = arith.addf %33, %34 : vector<16x128xf32>
    %cst_33 = arith.constant 0.000000e+00 : f32
    %36 = vector.broadcast %cst_33 : f32 to vector<16x128xf32>
    %37 = arith.cmpf oge, %35, %36 : vector<16x128xf32>
    %cst_34 = arith.constant 1.000000e-01 : f32
    %38 = vector.broadcast %cst_34 : f32 to vector<16x128xf32>
    %39 = arith.mulf %38, %35 : vector<16x128xf32>
    %40 = arith.select %37, %35, %39 : vector<16x128xi1>, vector<16x128xf32>
    %cst_35 = arith.constant dense<0.000000e+00> : vector<16x128xf32>
    %41 = tpu.matmul %3, %40, %cst_35 {dimension_numbers = #tpu.dot_dimension_numbers<[1], [0], [0], [1], [0, 0, 1, 1], [], []>} : vector<16x16xf32>, vector<16x128xf32>, vector<16x128xf32> -> vector<16x128xf32>
    %cst_36 = arith.constant dense<0.000000e+00> : vector<16x128xf32>
    %42 = tpu.matmul %5, %40, %cst_36 {dimension_numbers = #tpu.dot_dimension_numbers<[1], [0], [0], [1], [0, 0, 1, 1], [], []>} : vector<16x16xf32>, vector<16x128xf32>, vector<16x128xf32> -> vector<16x128xf32>
    %c0_37 = arith.constant 0 : index
    %c0_38 = arith.constant 0 : index
    %c0_39 = arith.constant 0 : index
    %43 = vector.load %arg4[%c0_37, %c0_38, %c0_39] : memref<3x128x64xf32, #tpu.memory_space<vmem>>, vector<1x128x64xf32>
    %44 = vector.shape_cast %43 : vector<1x128x64xf32> to vector<128x64xf32>
    %cst_40 = arith.constant dense<0.000000e+00> : vector<16x64xf32>
    %45 = tpu.matmul %41, %44, %cst_40 {dimension_numbers = #tpu.dot_dimension_numbers<[1], [0], [0], [1], [0, 0, 1, 1], [], []>} : vector<16x128xf32>, vector<128x64xf32>, vector<16x64xf32> -> vector<16x64xf32>
    %c1_41 = arith.constant 1 : index
    %c0_42 = arith.constant 0 : index
    %c0_43 = arith.constant 0 : index
    %46 = vector.load %arg4[%c1_41, %c0_42, %c0_43] : memref<3x128x64xf32, #tpu.memory_space<vmem>>, vector<1x128x64xf32>
    %47 = vector.shape_cast %46 : vector<1x128x64xf32> to vector<128x64xf32>
    %cst_44 = arith.constant dense<0.000000e+00> : vector<16x64xf32>
    %48 = tpu.matmul %40, %47, %cst_44 {dimension_numbers = #tpu.dot_dimension_numbers<[1], [0], [0], [1], [0, 0, 1, 1], [], []>} : vector<16x128xf32>, vector<128x64xf32>, vector<16x64xf32> -> vector<16x64xf32>
    %49 = arith.addf %45, %48 : vector<16x64xf32>
    %c2_45 = arith.constant 2 : index
    %c0_46 = arith.constant 0 : index
    %c0_47 = arith.constant 0 : index
    %50 = vector.load %arg4[%c2_45, %c0_46, %c0_47] : memref<3x128x64xf32, #tpu.memory_space<vmem>>, vector<1x128x64xf32>
    %51 = vector.shape_cast %50 : vector<1x128x64xf32> to vector<128x64xf32>
    %cst_48 = arith.constant dense<0.000000e+00> : vector<16x64xf32>
    %52 = tpu.matmul %42, %51, %cst_48 {dimension_numbers = #tpu.dot_dimension_numbers<[1], [0], [0], [1], [0, 0, 1, 1], [], []>} : vector<16x128xf32>, vector<128x64xf32>, vector<16x64xf32> -> vector<16x64xf32>
    %53 = arith.addf %49, %52 : vector<16x64xf32>
    %54 = vector.broadcast %8 : vector<1x64xf32> to vector<16x64xf32>
    %55 = arith.addf %53, %54 : vector<16x64xf32>
    %cst_49 = arith.constant 0.000000e+00 : f32
    %56 = vector.broadcast %cst_49 : f32 to vector<16x64xf32>
    %57 = arith.cmpf oge, %55, %56 : vector<16x64xf32>
    %cst_50 = arith.constant 1.000000e-01 : f32
    %58 = vector.broadcast %cst_50 : f32 to vector<16x64xf32>
    %59 = arith.mulf %58, %55 : vector<16x64xf32>
    %60 = arith.select %57, %55, %59 : vector<16x64xi1>, vector<16x64xf32>
    %61 = arith.addf %1, %60 : vector<16x64xf32>
    %cst_51 = arith.constant dense<0.000000e+00> : vector<16x64xf32>
    %62 = tpu.matmul %3, %61, %cst_51 {dimension_numbers = #tpu.dot_dimension_numbers<[1], [0], [0], [1], [0, 0, 1, 1], [], []>} : vector<16x16xf32>, vector<16x64xf32>, vector<16x64xf32> -> vector<16x64xf32>
    %cst_52 = arith.constant dense<0.000000e+00> : vector<16x64xf32>
    %63 = tpu.matmul %5, %61, %cst_52 {dimension_numbers = #tpu.dot_dimension_numbers<[1], [0], [0], [1], [0, 0, 1, 1], [], []>} : vector<16x16xf32>, vector<16x64xf32>, vector<16x64xf32> -> vector<16x64xf32>
    %c0_53 = arith.constant 0 : index
    %c0_54 = arith.constant 0 : index
    %c0_55 = arith.constant 0 : index
    %64 = vector.load %arg5[%c0_53, %c0_54, %c0_55] : memref<3x64x128xf32, #tpu.memory_space<vmem>>, vector<1x64x128xf32>
    %65 = vector.shape_cast %64 : vector<1x64x128xf32> to vector<64x128xf32>
    %cst_56 = arith.constant dense<0.000000e+00> : vector<16x128xf32>
    %66 = tpu.matmul %62, %65, %cst_56 {dimension_numbers = #tpu.dot_dimension_numbers<[1], [0], [0], [1], [0, 0, 1, 1], [], []>} : vector<16x64xf32>, vector<64x128xf32>, vector<16x128xf32> -> vector<16x128xf32>
    %c1_57 = arith.constant 1 : index
    %c0_58 = arith.constant 0 : index
    %c0_59 = arith.constant 0 : index
    %67 = vector.load %arg5[%c1_57, %c0_58, %c0_59] : memref<3x64x128xf32, #tpu.memory_space<vmem>>, vector<1x64x128xf32>
    %68 = vector.shape_cast %67 : vector<1x64x128xf32> to vector<64x128xf32>
    %cst_60 = arith.constant dense<0.000000e+00> : vector<16x128xf32>
    %69 = tpu.matmul %61, %68, %cst_60 {dimension_numbers = #tpu.dot_dimension_numbers<[1], [0], [0], [1], [0, 0, 1, 1], [], []>} : vector<16x64xf32>, vector<64x128xf32>, vector<16x128xf32> -> vector<16x128xf32>
    %70 = arith.addf %66, %69 : vector<16x128xf32>
    %c2_61 = arith.constant 2 : index
    %c0_62 = arith.constant 0 : index
    %c0_63 = arith.constant 0 : index
    %71 = vector.load %arg5[%c2_61, %c0_62, %c0_63] : memref<3x64x128xf32, #tpu.memory_space<vmem>>, vector<1x64x128xf32>
    %72 = vector.shape_cast %71 : vector<1x64x128xf32> to vector<64x128xf32>
    %cst_64 = arith.constant dense<0.000000e+00> : vector<16x128xf32>
    %73 = tpu.matmul %63, %72, %cst_64 {dimension_numbers = #tpu.dot_dimension_numbers<[1], [0], [0], [1], [0, 0, 1, 1], [], []>} : vector<16x64xf32>, vector<64x128xf32>, vector<16x128xf32> -> vector<16x128xf32>
    %74 = arith.addf %70, %73 : vector<16x128xf32>
    %75 = vector.broadcast %9 : vector<1x128xf32> to vector<16x128xf32>
    %76 = arith.addf %74, %75 : vector<16x128xf32>
    %cst_65 = arith.constant 0.000000e+00 : f32
    %77 = vector.broadcast %cst_65 : f32 to vector<16x128xf32>
    %78 = arith.cmpf oge, %76, %77 : vector<16x128xf32>
    %cst_66 = arith.constant 1.000000e-01 : f32
    %79 = vector.broadcast %cst_66 : f32 to vector<16x128xf32>
    %80 = arith.mulf %79, %76 : vector<16x128xf32>
    %81 = arith.select %78, %76, %80 : vector<16x128xi1>, vector<16x128xf32>
    %c0_67 = arith.constant 0 : index
    %c0_68 = arith.constant 0 : index
    %82 = vector.load %arg8[%c0_67, %c0_68] : memref<128x128xf32, #tpu.memory_space<vmem>>, vector<128x128xf32>
    %cst_69 = arith.constant dense<0.000000e+00> : vector<16x128xf32>
    %83 = tpu.matmul %81, %82, %cst_69 {dimension_numbers = #tpu.dot_dimension_numbers<[1], [0], [0], [1], [0, 0, 1, 1], [], []>} : vector<16x128xf32>, vector<128x128xf32>, vector<16x128xf32> -> vector<16x128xf32>
    %84 = arith.subf %81, %83 : vector<16x128xf32>
    %85 = arith.mulf %84, %84 : vector<16x128xf32>
    %c0_70 = arith.constant 0 : index
    %c0_71 = arith.constant 0 : index
    %86 = vector.load %arg8[%c0_70, %c0_71] : memref<128x128xf32, #tpu.memory_space<vmem>>, vector<128x128xf32>
    %cst_72 = arith.constant dense<0.000000e+00> : vector<16x128xf32>
    %87 = tpu.matmul %85, %86, %cst_72 {dimension_numbers = #tpu.dot_dimension_numbers<[1], [0], [0], [1], [0, 0, 1, 1], [], []>} : vector<16x128xf32>, vector<128x128xf32>, vector<16x128xf32> -> vector<16x128xf32>
    %cst_73 = arith.constant 9.99999974E-6 : f32
    %88 = vector.broadcast %cst_73 : f32 to vector<16x128xf32>
    %89 = arith.addf %87, %88 : vector<16x128xf32>
    %90 = math.rsqrt %89 : vector<16x128xf32>
    %91 = arith.mulf %84, %90 : vector<16x128xf32>
    %92 = vector.broadcast %10 : vector<1x128xf32> to vector<16x128xf32>
    %93 = arith.mulf %91, %92 : vector<16x128xf32>
    %94 = vector.broadcast %11 : vector<1x128xf32> to vector<16x128xf32>
    %95 = arith.addf %93, %94 : vector<16x128xf32>
    %c0_74 = arith.constant 0 : index
    %c0_75 = arith.constant 0 : index
    %c0_76 = arith.constant 0 : index
    %96 = vector.load %arg9[%c0_74, %c0_75, %c0_76] : memref<1x16x128xf32, #tpu.memory_space<vmem>>, vector<1x16x128xf32>
    %97 = vector.shape_cast %96 : vector<1x16x128xf32> to vector<16x128xf32>
    %98 = vector.shape_cast %95 : vector<16x128xf32> to vector<1x16x128xf32>
    tpu.vector_store %arg9[%c0_74, %c0_75, %c0_76], %98 {strides = array<i32>} : memref<1x16x128xf32, #tpu.memory_space<vmem>>, vector<1x16x128xf32>,
    return
  }
  func.func @transform_0(%arg0: i32) -> (i32, i32, i32) {
    %c0_i32 = arith.constant 0 : i32
    %c0_i32_0 = arith.constant 0 : i32
    %c0_i32_1 = arith.constant 0 : i32
    return %arg0, %c0_i32, %c0_i32_0 : i32, i32, i32
  }
  func.func @transform_1(%arg0: i32) -> (i32, i32, i32) {
    %c0_i32 = arith.constant 0 : i32
    %c0_i32_0 = arith.constant 0 : i32
    %c0_i32_1 = arith.constant 0 : i32
    %c0_i32_2 = arith.constant 0 : i32
    return %c0_i32, %c0_i32_0, %c0_i32_1 : i32, i32, i32
  }
  func.func @transform_2(%arg0: i32) -> (i32, i32) {
    %c0_i32 = arith.constant 0 : i32
    %c0_i32_0 = arith.constant 0 : i32
    %c0_i32_1 = arith.constant 0 : i32
    return %c0_i32, %c0_i32_0 : i32, i32
  }
  func.func @transform_3(%arg0: i32) -> (i32, i32, i32) {
    %c0_i32 = arith.constant 0 : i32
    %c0_i32_0 = arith.constant 0 : i32
    %c0_i32_1 = arith.constant 0 : i32
    %c0_i32_2 = arith.constant 0 : i32
    return %c0_i32, %c0_i32_0, %c0_i32_1 : i32, i32, i32
  }
  func.func @transform_4(%arg0: i32) -> (i32, i32, i32) {
    %c0_i32 = arith.constant 0 : i32
    %c0_i32_0 = arith.constant 0 : i32
    %c0_i32_1 = arith.constant 0 : i32
    %c0_i32_2 = arith.constant 0 : i32
    return %c0_i32, %c0_i32_0, %c0_i32_1 : i32, i32, i32
  }
  func.func @transform_5(%arg0: i32) -> (i32, i32) {
    %c0_i32 = arith.constant 0 : i32
    %c0_i32_0 = arith.constant 0 : i32
    %c0_i32_1 = arith.constant 0 : i32
    return %c0_i32, %c0_i32_0 : i32, i32
  }
  func.func @transform_6(%arg0: i32) -> (i32, i32, i32) {
    %c0_i32 = arith.constant 0 : i32
    %c0_i32_0 = arith.constant 0 : i32
    %c0_i32_1 = arith.constant 0 : i32
    %c0_i32_2 = arith.constant 0 : i32
    return %c0_i32, %c0_i32_0, %c0_i32_1 : i32, i32, i32
  }
  func.func @transform_7(%arg0: i32) -> (i32, i32) {
    %c0_i32 = arith.constant 0 : i32
    %c0_i32_0 = arith.constant 0 : i32
    %c0_i32_1 = arith.constant 0 : i32
    return %c0_i32, %c0_i32_0 : i32, i32
  }
  func.func @transform_8(%arg0: i32) -> (i32, i32, i32) {
    %c0_i32 = arith.constant 0 : i32
    %c0_i32_0 = arith.constant 0 : i32
    %c0_i32_1 = arith.constant 0 : i32
    return %arg0, %c0_i32, %c0_i32_0 : i32, i32, i32
  }
}

</mosaic_0001>

<llo_original>
// kernel: tpu_custom_call.1
$region0: #{tpu_custom_call.1}
  #allocation0 [shape = 'u32[]', space=smem, size = 0x4, offset = 0x4, fixed_abs, tag = 'smem constant byte address 0x4 - core index']
  #allocation1 [shape = 'u32[72,128]{1,0:T(1,128)}', space=vmem, size = 0x9000, scoped, tag = 'internal scratch']
  %s0 = inlined_call_operand.vmem [shape: f32[2,16,64], index: 0, kind: input, shape index: {}]
  %s1 = inlined_call_operand.vmem [shape: f32[3,64,128], index: 1, kind: input, shape index: {}]
  %s2 = inlined_call_operand.vmem [shape: f32[128,128], index: 2, kind: input, shape index: {}]
  %s3 = inlined_call_operand.vmem [shape: f32[3,128,64], index: 3, kind: input, shape index: {}]
  %s4 = inlined_call_operand.vmem [shape: f32[3,64,128], index: 4, kind: input, shape index: {}]
  %s5 = inlined_call_operand.hbm [shape: f32[8,128], index: 5, kind: input, shape index: {}]
  %s6 = inlined_call_operand.vmem [shape: f32[2,16,16], index: 6, kind: input, shape index: {}]
  %s7 = inlined_call_operand.hbm [shape: f32[128,128], index: 7, kind: input, shape index: {}]
  %s8 = inlined_call_operand.hbm [shape: f32[2,16,128], index: 8, kind: output, shape index: {}]
  %s9 = sld [smem:[#allocation0]]
  $region73: #{tpu_custom_call.1} parent=0
    _
  %s11 = ssub.s32 1, %s9
  %s12 = scalar_select 0, %s11, %s9
  $region1: #{tpu_custom_call.1} parent=0
    #allocation2 [shape = 'u8[4096]{0}', space=vmem, size = 0x1000, scoped, tag = 'input window, operand 5, single buffered']
    #allocation3 [shape = 's32[2]{0}', space=sflag, size = 0x8, scoped, tag = 'scoped memory for tpu_custom_call.1']
    #allocation4 [shape = 's32[2]{0}', space=sflag, size = 0x8, scoped, tag = 'scoped memory for tpu_custom_call.1']
    #allocation5 [shape = 'u8[65536]{0}', space=vmem, size = 0x10000, scoped, tag = 'input window, operand 7, single buffered']
    #allocation6 [shape = 's32[1]{0}', space=sflag, size = 0x4, scoped, tag = 'scoped memory for tpu_custom_call.1']
    #allocation7 [shape = 'u8[16384]{0}', space=vmem, size = 0x4000, scoped, tag = 'output window, operand 0']
    %13 = vsyncpa [#allocation3], 0
    %14 = vsyncpa [#allocation6], 0
    %15 = vsyncpa [#allocation4], 0
    %s16 = scalar_lea.sflag [#allocation4], 1
    %17 = vsyncpa %s16, 0
    loop: start=0, step=1, limit=4
    $region2: #{tpu_custom_call.1} parent=1 // loop_pre_header
      _
    $region3: #{tpu_custom_call.1} parent=1 // loop_header
      %s19 = sphi 0, %s23
      %p20 = scmp.ge.s32.totalorder %s19, 4
      %s29 = sphi 0, %s31
      %s32 = sphi 0, %s29
      %s33 = sphi 0, %s32
      %s49 = sphi 0, %s33
      %s53 = sphi 0, %s53
      %s55 = sphi 0, %s53
      %s56 = sphi 0, %s55
      %s70 = sphi 0, %s56
      %s74 = sphi 0, %s74
      %s76 = sphi 0, %s74
      %s77 = sphi 0, %s76
      %s91 = sphi 0, %s77
      %s95 = sphi 0, %s95
      %s97 = sphi 0, %s95
      %s98 = sphi 0, %s97
      %s112 = sphi 0, %s98
      %s116 = sphi 0, %s116
      %s118 = sphi 0, %s116
      %s119 = sphi 0, %s118
      %s133 = sphi 0, %s119
      %s137 = sphi 0, %s137
      %s139 = sphi 0, %s137
      %s140 = sphi 0, %s139
      %s154 = sphi 0, %s140
      %s158 = sphi 0, %s158
      %s160 = sphi 0, %s158
      %s161 = sphi 0, %s160
      %s175 = sphi 0, %s161
      %s179 = sphi 0, %s179
      %s181 = sphi 0, %s179
      %s182 = sphi 0, %s181
      %s196 = sphi 0, %s182
      %s202 = sphi 0, %s204
      %s205 = sphi 0, %s202
      %s206 = sphi 0, %s205
      %s222 = sphi 0, %s206
    $region4: #{tpu_custom_call.1} parent=1 // loop_header_branch
      %22 = sbr.rel (%p20) target = $region8
    $region5: #{tpu_custom_call.1} parent=1 // loop_body
      %s24 = ssub.s32 %s19, 1
      %s25 = ssub.s32 %s19, 2
      %s26 = sadd.s32 %s19, 1
      %s27 = ssub.s32 %s19, %s26
      %p28 = scmp.eq.s32.totalorder %s27, 0
      %s30 = sadd.s32 %s29, 1
      %s31 = scalar_select %p28, %s29, %s30
      %p34 = pneg %p28
      %p35 = scmp.eq.s32.totalorder %s19, 1
      %p36 = por %p34, %p35
      %p37 = scmp.ne.s32.totalorder %s29, %s32
      %p38 = scmp.eq.s32.totalorder %s19, 0
      %p39 = por %p37, %p38
      %p40 = scmp.ne.s32.totalorder %s29, %s32
      %p41 = scmp.eq.s32.totalorder %s24, 1
      %p42 = por %p40, %p41
      %p43 = scmp.ne.s32.totalorder %s32, %s33
      %p44 = scmp.eq.s32.totalorder %s24, 0
      %p45 = por %p43, %p44
      %p46 = scmp.ne.s32.totalorder %s32, %s33
      %p47 = scmp.eq.s32.totalorder %s25, 1
      %p48 = por %p46, %p47
      %p50 = scmp.ne.s32.totalorder %s33, %s49
      %p51 = scmp.eq.s32.totalorder %s25, 0
      %p52 = por %p50, %p51
      %s54 = sadd.s32 %s53, 1
      %p57 = scmp.eq.s32.totalorder %s19, 1
      %p58 = scmp.ne.s32.totalorder %s53, %s55
      %p59 = scmp.eq.s32.totalorder %s19, 0
      %p60 = por %p58, %p59
      %p61 = scmp.ne.s32.totalorder %s53, %s55
      %p62 = scmp.eq.s32.totalorder %s24, 1
      %p63 = por %p61, %p62
      %p64 = scmp.ne.s32.totalorder %s55, %s56
      %p65 = scmp.eq.s32.totalorder %s24, 0
      %p66 = por %p64, %p65
      %p67 = scmp.ne.s32.totalorder %s55, %s56
      %p68 = scmp.eq.s32.totalorder %s25, 1
      %p69 = por %p67, %p68
      %p71 = scmp.ne.s32.totalorder %s56, %s70
      %p72 = scmp.eq.s32.totalorder %s25, 0
      %p73 = por %p71, %p72
      %s75 = sadd.s32 %s74, 1
      %p78 = scmp.eq.s32.totalorder %s19, 1
      %p79 = scmp.ne.s32.totalorder %s74, %s76
      %p80 = scmp.eq.s32.totalorder %s19, 0
      %p81 = por %p79, %p80
      %p82 = scmp.ne.s32.totalorder %s74, %s76
      %p83 = scmp.eq.s32.totalorder %s24, 1
      %p84 = por %p82, %p83
      %p85 = scmp.ne.s32.totalorder %s76, %s77
      %p86 = scmp.eq.s32.totalorder %s24, 0
      %p87 = por %p85, %p86
      %p88 = scmp.ne.s32.totalorder %s76, %s77
      %p89 = scmp.eq.s32.totalorder %s25, 1
      %p90 = por %p88, %p89
      %p92 = scmp.ne.s32.totalorder %s77, %s91
      %p93 = scmp.eq.s32.totalorder %s25, 0
      %p94 = por %p92, %p93
      %s96 = sadd.s32 %s95, 1
      %p99 = scmp.eq.s32.totalorder %s19, 1
      %p100 = scmp.ne.s32.totalorder %s95, %s97
      %p101 = scmp.eq.s32.totalorder %s19, 0
      %p102 = por %p100, %p101
      %p103 = scmp.ne.s32.totalorder %s95, %s97
      %p104 = scmp.eq.s32.totalorder %s24, 1
      %p105 = por %p103, %p104
      %p106 = scmp.ne.s32.totalorder %s97, %s98
      %p107 = scmp.eq.s32.totalorder %s24, 0
      %p108 = por %p106, %p107
      %p109 = scmp.ne.s32.totalorder %s97, %s98
      %p110 = scmp.eq.s32.totalorder %s25, 1
      %p111 = por %p109, %p110
      %p113 = scmp.ne.s32.totalorder %s98, %s112
      %p114 = scmp.eq.s32.totalorder %s25, 0
      %p115 = por %p113, %p114
      %s117 = sadd.s32 %s116, 1
      %p120 = scmp.eq.s32.totalorder %s19, 1
      %p121 = scmp.ne.s32.totalorder %s116, %s118
      %p122 = scmp.eq.s32.totalorder %s19, 0
      %p123 = por %p121, %p122
      %p124 = scmp.ne.s32.totalorder %s116, %s118
      %p125 = scmp.eq.s32.totalorder %s24, 1
      %p126 = por %p124, %p125
      %p127 = scmp.ne.s32.totalorder %s118, %s119
      %p128 = scmp.eq.s32.totalorder %s24, 0
      %p129 = por %p127, %p128
      %p130 = scmp.ne.s32.totalorder %s118, %s119
      %p131 = scmp.eq.s32.totalorder %s25, 1
      %p132 = por %p130, %p131
      %p134 = scmp.ne.s32.totalorder %s119, %s133
      %p135 = scmp.eq.s32.totalorder %s25, 0
      %p136 = por %p134, %p135
      %s138 = sadd.s32 %s137, 1
      %p141 = scmp.eq.s32.totalorder %s19, 1
      %p142 = scmp.ne.s32.totalorder %s137, %s139
      %p143 = scmp.eq.s32.totalorder %s19, 0
      %p144 = por %p142, %p143
      %p145 = scmp.ne.s32.totalorder %s137, %s139
      %p146 = scmp.eq.s32.totalorder %s24, 1
      %p147 = por %p145, %p146
      %p148 = scmp.ne.s32.totalorder %s139, %s140
      %p149 = scmp.eq.s32.totalorder %s24, 0
      %p150 = por %p148, %p149
      %p151 = scmp.ne.s32.totalorder %s139, %s140
      %p152 = scmp.eq.s32.totalorder %s25, 1
      %p153 = por %p151, %p152
      %p155 = scmp.ne.s32.totalorder %s140, %s154
      %p156 = scmp.eq.s32.totalorder %s25, 0
      %p157 = por %p155, %p156
      %s159 = sadd.s32 %s158, 1
      %p162 = scmp.eq.s32.totalorder %s19, 1
      %p163 = scmp.ne.s32.totalorder %s158, %s160
      %p164 = scmp.eq.s32.totalorder %s19, 0
      %p165 = por %p163, %p164
      %p166 = scmp.ne.s32.totalorder %s158, %s160
      %p167 = scmp.eq.s32.totalorder %s24, 1
      %p168 = por %p166, %p167
      %p169 = scmp.ne.s32.totalorder %s160, %s161
      %p170 = scmp.eq.s32.totalorder %s24, 0
      %p171 = por %p169, %p170
      %p172 = scmp.ne.s32.totalorder %s160, %s161
      %p173 = scmp.eq.s32.totalorder %s25, 1
      %p174 = por %p172, %p173
      %p176 = scmp.ne.s32.totalorder %s161, %s175
      %p177 = scmp.eq.s32.totalorder %s25, 0
      %p178 = por %p176, %p177
      %s180 = sadd.s32 %s179, 1
      %p183 = scmp.eq.s32.totalorder %s19, 1
      %p184 = scmp.ne.s32.totalorder %s179, %s181
      %p185 = scmp.eq.s32.totalorder %s19, 0
      %p186 = por %p184, %p185
      %p187 = scmp.ne.s32.totalorder %s179, %s181
      %p188 = scmp.eq.s32.totalorder %s24, 1
      %p189 = por %p187, %p188
      %p190 = scmp.ne.s32.totalorder %s181, %s182
      %p191 = scmp.eq.s32.totalorder %s24, 0
      %p192 = por %p190, %p191
      %p193 = scmp.ne.s32.totalorder %s181, %s182
      %p194 = scmp.eq.s32.totalorder %s25, 1
      %p195 = por %p193, %p194
      %p197 = scmp.ne.s32.totalorder %s182, %s196
      %p198 = scmp.eq.s32.totalorder %s25, 0
      %p199 = por %p197, %p198
      %s200 = ssub.s32 %s19, %s26
      %p201 = scmp.eq.s32.totalorder %s200, 0
      %s203 = sadd.s32 %s202, 1
      %s204 = scalar_select %p201, %s202, %s203
      %p207 = pneg %p201
      %p208 = scmp.eq.s32.totalorder %s19, 1
      %p209 = por %p207, %p208
      %p210 = scmp.ne.s32.totalorder %s202, %s205
      %p211 = scmp.eq.s32.totalorder %s19, 0
      %p212 = por %p210, %p211
      %p213 = scmp.ne.s32.totalorder %s202, %s205
      %p214 = scmp.eq.s32.totalorder %s24, 1
      %p215 = por %p213, %p214
      %p216 = scmp.ne.s32.totalorder %s205, %s206
      %p217 = scmp.eq.s32.totalorder %s24, 0
      %p218 = por %p216, %p217
      %p219 = scmp.ne.s32.totalorder %s205, %s206
      %p220 = scmp.eq.s32.totalorder %s25, 1
      %p221 = por %p219, %p220
      %p223 = scmp.ne.s32.totalorder %s206, %s222
      %p224 = scmp.eq.s32.totalorder %s25, 0
      %p225 = por %p223, %p224
      %p226 = scmp.le.s32.totalorder 1, %s19
      %p227 = scmp.lt.s32.totalorder %s19, 3
      %p228 = pnand %p226, %p227
      %p229 = pneg %p228
      // Predicated region
      $region9: #{tpu_custom_call.1} parent=5 // pred_check
        _
      $region10: #{tpu_custom_call.1} parent=5 // pred_check_branch
        %231 = sbr.rel (%p228) target = $region12
      $region11: #{tpu_custom_call.1} parent=5 // pred_region
        %s232 = ssub.s32 %s19, 1
        // Predicated region
        $region13: #{tpu_custom_call.1} parent=11 // pred_check
          %p233 = pneg %p66
        $region14: #{tpu_custom_call.1} parent=11 // pred_check_branch
          %235 = sbr.rel (%p233) target = $region16
        $region15: #{tpu_custom_call.1} parent=11 // pred_region
          _
        $region16: #{tpu_custom_call.1} parent=11 // pred_fallthru
          _
        // Predicated region
        $region17: #{tpu_custom_call.1} parent=11 // pred_check
          %p236 = pneg %p87
        $region18: #{tpu_custom_call.1} parent=11 // pred_check_branch
          %238 = sbr.rel (%p236) target = $region20
        $region19: #{tpu_custom_call.1} parent=11 // pred_region
          _
        $region20: #{tpu_custom_call.1} parent=11 // pred_fallthru
          _
        // Predicated region
        $region21: #{tpu_custom_call.1} parent=11 // pred_check
          %p239 = pneg %p108
        $region22: #{tpu_custom_call.1} parent=11 // pred_check_branch
          %241 = sbr.rel (%p239) target = $region24
        $region23: #{tpu_custom_call.1} parent=11 // pred_region
          _
        $region24: #{tpu_custom_call.1} parent=11 // pred_fallthru
          _
        // Predicated region
        $region25: #{tpu_custom_call.1} parent=11 // pred_check
          %p242 = pneg %p129
        $region26: #{tpu_custom_call.1} parent=11 // pred_check_branch
          %244 = sbr.rel (%p242) target = $region28
        $region27: #{tpu_custom_call.1} parent=11 // pred_region
          _
        $region28: #{tpu_custom_call.1} parent=11 // pred_fallthru
          _
        // Predicated region
        $region29: #{tpu_custom_call.1} parent=11 // pred_check
          %p245 = pneg %p150
        $region30: #{tpu_custom_call.1} parent=11 // pred_check_branch
          %247 = sbr.rel (%p245) target = $region32
        $region31: #{tpu_custom_call.1} parent=11 // pred_region
          %249 = vsyncadd [#allocation3], 0
          %s251 = sshll.u32 %s5, 4
          %s252 = int_to_ptr.hbm [resolvable:$true] %s251
          %s253 = sshll.u32 [#allocation2], 4
          %s254 = int_to_ptr.vmem [resolvable:$true] %s253
          %256 = dma.hbm_to_vmem [thread:$0]  %s252, 128, %s254, [#allocation3]
        $region32: #{tpu_custom_call.1} parent=11 // pred_fallthru
          _
        // Predicated region
        $region33: #{tpu_custom_call.1} parent=11 // pred_check
          %p257 = pneg %p171
        $region34: #{tpu_custom_call.1} parent=11 // pred_check_branch
          %259 = sbr.rel (%p257) target = $region36
        $region35: #{tpu_custom_call.1} parent=11 // pred_region
          _
        $region36: #{tpu_custom_call.1} parent=11 // pred_fallthru
          _
        // Predicated region
        $region37: #{tpu_custom_call.1} parent=11 // pred_check
          %p260 = pneg %p192
        $region38: #{tpu_custom_call.1} parent=11 // pred_check_branch
          %262 = sbr.rel (%p260) target = $region40
        $region39: #{tpu_custom_call.1} parent=11 // pred_region
          %264 = vsyncadd [#allocation6], 0
          %s265 = sshll.u32 %s7, 4
          %s266 = int_to_ptr.hbm [resolvable:$true] %s265
          %s267 = sshll.u32 [#allocation5], 4
          %s268 = int_to_ptr.vmem [resolvable:$true] %s267
          %273 = dma.hbm_to_vmem [thread:$0]  %s266, 2048, %s268, [#allocation6], 128, 128, 8
        $region40: #{tpu_custom_call.1} parent=11 // pred_fallthru
          _
      $region12: #{tpu_custom_call.1} parent=5 // pred_fallthru
        _
      %p274 = scmp.lt.s32.totalorder %s19, 2
      // Predicated region
      $region41: #{tpu_custom_call.1} parent=5 // pred_check
        %p275 = pneg %p274
      $region42: #{tpu_custom_call.1} parent=5 // pred_check_branch
        %277 = sbr.rel (%p275) target = $region44
      $region43: #{tpu_custom_call.1} parent=5 // pred_region
        // Predicated region
        $region45: #{tpu_custom_call.1} parent=43 // pred_check
          %p278 = pneg %p39
        $region46: #{tpu_custom_call.1} parent=43 // pred_check_branch
          %280 = sbr.rel (%p278) target = $region48
        $region47: #{tpu_custom_call.1} parent=43 // pred_region
          %p281 = scmp.lt.s32.totalorder %s19, 1
          %s282 = scalar_select %p281, %s19, 1
          %s283 = smul.addr %s282, 2
          %s284 = smul.addr %s283, 8
          %s285 = scalar_lea.vmem %s0, %s284
        $region48: #{tpu_custom_call.1} parent=43 // pred_fallthru
          _
      $region44: #{tpu_custom_call.1} parent=5 // pred_fallthru
        _
      %p286 = scmp.le.s32.totalorder 1, %s19
      %p287 = scmp.lt.s32.totalorder %s19, 3
      %p288 = pnand %p286, %p287
      %p289 = pneg %p288
      // Predicated region
      $region49: #{tpu_custom_call.1} parent=5 // pred_check
        _
      $region50: #{tpu_custom_call.1} parent=5 // pred_check_branch
        %291 = sbr.rel (%p288) target = $region52
      $region51: #{tpu_custom_call.1} parent=5 // pred_region
        %s292 = ssub.s32 %s19, 1
        // Predicated region
        $region53: #{tpu_custom_call.1} parent=51 // pred_check
          %p293 = pneg %p150
        $region54: #{tpu_custom_call.1} parent=51 // pred_check_branch
          %295 = sbr.rel (%p293) target = $region56
        $region55: #{tpu_custom_call.1} parent=51 // pred_region
          %297 = dma.done [#allocation3], 128
        $region56: #{tpu_custom_call.1} parent=51 // pred_fallthru
          _
        // Predicated region
        $region57: #{tpu_custom_call.1} parent=51 // pred_check
          %p298 = pneg %p192
        $region58: #{tpu_custom_call.1} parent=51 // pred_check_branch
          %300 = sbr.rel (%p298) target = $region60
        $region59: #{tpu_custom_call.1} parent=51 // pred_region
          %302 = dma.done [#allocation6], 2048
        $region60: #{tpu_custom_call.1} parent=51 // pred_fallthru
          _
        %p303 = scmp.lt.s32.totalorder %s24, 1
        %s304 = scalar_select %p303, %s24, 1
        %s305 = smul.addr %s304, 2
        %s306 = smul.addr %s305, 8
        %s307 = scalar_lea.vmem %s0, %s306
        %p308 = pneg %p45
        %p309 = pneg %p42
        %p310 = pneg %p66
        %p311 = pneg %p63
        %p312 = pneg %p87
        %p313 = pneg %p84
        %p314 = pneg %p108
        %p315 = pneg %p105
        %p316 = pneg %p129
        %p317 = pneg %p126
        %p318 = pneg %p150
        %p319 = pneg %p147
        %p320 = pneg %p171
        %p321 = pneg %p168
        %p322 = pneg %p192
        %p323 = pneg %p189
        %p324 = pneg %p218
        %p325 = pneg %p215
        %s326 = sand.u32 %s205, 1
        %s327 = scalar_lea.sflag [#allocation4], %s326
        %s328 = sand.u32 %s205, 1
        %s329 = smul.addr %s328, 16
        %s330 = scalar_lea.vmem [#allocation7], %s329
        %p331 = scmp.lt.s32.totalorder %s24, 1
        %s332 = scalar_select %p331, %s24, 1
        %s333 = smul.addr %s332, 2
        %s334 = smul.addr %s333, 8
        %s335 = scalar_lea.vmem %s0, %s334
        %v336 = vld [vmem:[%s335] sm:$0xff]
        %v337 = vld [vmem:[%s335 + $0x8] sm:$0xff]
        %v338 = vld [vmem:[%s6] sm:$0xff]
        %v339 = vld [vmem:[%s6 + $0x8] sm:$0xff]
        %s340 = scalar_lea.vmem %s6, 16
        %v341 = vld [vmem:[%s340] sm:$0xff]
        %v342 = vld [vmem:[%s340 + $0x8] sm:$0xff]
        %v343 = vld [vmem:[#allocation2] sm:$0x1]
        %v344 = vld [vmem:[#allocation2 + $0x1] sm:$0x1]
        %v345 = vld [vmem:[#allocation2 + $0x2] sm:$0x1]
        %v346 = vld [vmem:[#allocation2 + $0x3] sm:$0x1]
        %v347 = vld [vmem:[#allocation2 + $0x4] sm:$0x1]
        %v348 = vld [vmem:[#allocation2 + $0x5] sm:$0x1]
        %vm349 = vcmask 130048
        %v351 = vsel %vm349, %v338, 0
        %v354 = vsel %vm349, %v339, 0
        %356 = vmatpush.msra.mxu0 0.0
        %357 = vmatpush.msra.mxu0 0.0
        %358 = vmatpush.msra.mxu0 0.0
        %359 = vmatpush.msra.mxu0 0.0
        %360 = vmatpush.msra.mxu0 0.0
        %361 = vmatpush.msra.mxu0 0.0
        %362 = vmatpush.msra.mxu0 0.0
        %363 = vmatpush.msra.mxu0 0.0
        %364 = vmatpush.msra.mxu0 0.0
        %365 = vmatpush.msra.mxu0 0.0
        %366 = vmatpush.msra.mxu0 0.0
        %367 = vmatpush.msra.mxu0 0.0
        %368 = vmatpush.msra.mxu0 0.0
        %369 = vmatpush.msra.mxu0 0.0
        %370 = vmatpush.msra.mxu0 %v337
        %371 = vmatpush.msra.mxu0 %v336
        %372 = vmatmul.f32.gmra.mxu0 %v351
        %v373 = vpop.f32.mrf.mxu0
        %v374 = vadd.f32 0.0, %v373
        %375 = vmatmul.f32.gmra.mxu0 %v354
        %v376 = vpop.f32.mrf.mxu0
        %v377 = vadd.f32 0.0, %v376
        %378 = vdwg.mxu0
        %v380 = vsel %vm349, %v341, 0
        %v383 = vsel %vm349, %v342, 0
        %385 = vmatpush.msra.mxu0 0.0
        %386 = vmatpush.msra.mxu0 0.0
        %387 = vmatpush.msra.mxu0 0.0
        %388 = vmatpush.msra.mxu0 0.0
        %389 = vmatpush.msra.mxu0 0.0
        %390 = vmatpush.msra.mxu0 0.0
        %391 = vmatpush.msra.mxu0 0.0
        %392 = vmatpush.msra.mxu0 0.0
        %393 = vmatpush.msra.mxu0 0.0
        %394 = vmatpush.msra.mxu0 0.0
        %395 = vmatpush.msra.mxu0 0.0
        %396 = vmatpush.msra.mxu0 0.0
        %397 = vmatpush.msra.mxu0 0.0
        %398 = vmatpush.msra.mxu0 0.0
        %399 = vmatpush.msra.mxu0 %v337
        %400 = vmatpush.msra.mxu0 %v336
        %401 = vmatmul.f32.gmra.mxu0 %v380
        %v402 = vpop.f32.mrf.mxu0
        %v403 = vadd.f32 0.0, %v402
        %404 = vmatmul.f32.gmra.mxu0 %v383
        %v405 = vpop.f32.mrf.mxu0
        %v406 = vadd.f32 0.0, %v405
        %407 = vdwg.mxu0
        %v408 = vld [vmem:[%s1] sm:$0xff]
        %v409 = vld [vmem:[%s1 + $0x8] sm:$0xff]
        %v410 = vld [vmem:[%s1 + $0x10] sm:$0xff]
        %v411 = vld [vmem:[%s1 + $0x18] sm:$0xff]
        %v412 = vld [vmem:[%s1 + $0x20] sm:$0xff]
        %v413 = vld [vmem:[%s1 + $0x28] sm:$0xff]
        %v414 = vld [vmem:[%s1 + $0x30] sm:$0xff]
        %v415 = vld [vmem:[%s1 + $0x38] sm:$0xff]
        %s416 = scalar_lea.vmem %s1, 64
        %v417 = vld [vmem:[%s416] sm:$0xff]
        %v418 = vld [vmem:[%s416 + $0x8] sm:$0xff]
        %v419 = vld [vmem:[%s416 + $0x10] sm:$0xff]
        %v420 = vld [vmem:[%s416 + $0x18] sm:$0xff]
        %v421 = vld [vmem:[%s416 + $0x20] sm:$0xff]
        %v422 = vld [vmem:[%s416 + $0x28] sm:$0xff]
        %v423 = vld [vmem:[%s416 + $0x30] sm:$0xff]
        %v424 = vld [vmem:[%s416 + $0x38] sm:$0xff]
        %vm425 = vcmask 523264
        %v427 = vsel %vm425, %v336, 0
        %v430 = vsel %vm425, %v337, 0
        %432 = vmatpush.msra.mxu0 0.0
        %433 = vmatpush.msra.mxu0 0.0
        %434 = vmatpush.msra.mxu0 0.0
        %435 = vmatpush.msra.mxu0 0.0
        %436 = vmatpush.msra.mxu0 0.0
        %437 = vmatpush.msra.mxu0 0.0
        %438 = vmatpush.msra.mxu0 0.0
        %439 = vmatpush.msra.mxu0 0.0
        %440 = vmatpush.msra.mxu0 %v424
        %441 = vmatpush.msra.mxu0 %v423
        %442 = vmatpush.msra.mxu0 %v422
        %443 = vmatpush.msra.mxu0 %v421
        %444 = vmatpush.msra.mxu0 %v420
        %445 = vmatpush.msra.mxu0 %v419
        %446 = vmatpush.msra.mxu0 %v418
        %447 = vmatpush.msra.mxu0 %v417
        %448 = vmatmul.f32.gmra.mxu0 %v427
        %v449 = vpop.f32.mrf.mxu0
        %v450 = vadd.f32 0.0, %v449
        %451 = vmatmul.f32.gmra.mxu0 %v430
        %v452 = vpop.f32.mrf.mxu0
        %v453 = vadd.f32 0.0, %v452
        %454 = vdwg.mxu0
        %v456 = vsel %vm425, %v374, 0
        %v459 = vsel %vm425, %v377, 0
        %461 = vmatpush.msra.mxu0 0.0
        %462 = vmatpush.msra.mxu0 0.0
        %463 = vmatpush.msra.mxu0 0.0
        %464 = vmatpush.msra.mxu0 0.0
        %465 = vmatpush.msra.mxu0 0.0
        %466 = vmatpush.msra.mxu0 0.0
        %467 = vmatpush.msra.mxu0 0.0
        %468 = vmatpush.msra.mxu0 0.0
        %469 = vmatpush.msra.mxu0 %v415
        %470 = vmatpush.msra.mxu0 %v414
        %471 = vmatpush.msra.mxu0 %v413
        %472 = vmatpush.msra.mxu0 %v412
        %473 = vmatpush.msra.mxu0 %v411
        %474 = vmatpush.msra.mxu0 %v410
        %475 = vmatpush.msra.mxu0 %v409
        %476 = vmatpush.msra.mxu0 %v408
        %477 = vmatmul.f32.gmra.mxu0 %v456
        %v478 = vpop.f32.mrf.mxu0
        %v479 = vadd.f32 %v450, %v478
        %480 = vmatmul.f32.gmra.mxu0 %v459
        %v481 = vpop.f32.mrf.mxu0
        %v482 = vadd.f32 %v453, %v481
        %483 = vdwg.mxu0
        %s484 = scalar_lea.vmem %s1, 128
        %v485 = vld [vmem:[%s484] sm:$0xff]
        %v486 = vld [vmem:[%s484 + $0x8] sm:$0xff]
        %v487 = vld [vmem:[%s484 + $0x10] sm:$0xff]
        %v488 = vld [vmem:[%s484 + $0x18] sm:$0xff]
        %v489 = vld [vmem:[%s484 + $0x20] sm:$0xff]
        %v490 = vld [vmem:[%s484 + $0x28] sm:$0xff]
        %v491 = vld [vmem:[%s484 + $0x30] sm:$0xff]
        %v492 = vld [vmem:[%s484 + $0x38] sm:$0xff]
        %v494 = vsel %vm425, %v403, 0
        %v497 = vsel %vm425, %v406, 0
        %499 = vmatpush.msra.mxu0 0.0
        %500 = vmatpush.msra.mxu0 0.0
        %501 = vmatpush.msra.mxu0 0.0
        %502 = vmatpush.msra.mxu0 0.0
        %503 = vmatpush.msra.mxu0 0.0
        %504 = vmatpush.msra.mxu0 0.0
        %505 = vmatpush.msra.mxu0 0.0
        %506 = vmatpush.msra.mxu0 0.0
        %507 = vmatpush.msra.mxu0 %v492
        %508 = vmatpush.msra.mxu0 %v491
        %509 = vmatpush.msra.mxu0 %v490
        %510 = vmatpush.msra.mxu0 %v489
        %511 = vmatpush.msra.mxu0 %v488
        %512 = vmatpush.msra.mxu0 %v487
        %513 = vmatpush.msra.mxu0 %v486
        %514 = vmatpush.msra.mxu0 %v485
        %515 = vmatmul.f32.gmra.mxu0 %v494
        %v516 = vpop.f32.mrf.mxu0
        %v517 = vadd.f32 0.0, %v516
        %518 = vmatmul.f32.gmra.mxu0 %v497
        %v519 = vpop.f32.mrf.mxu0
        %v520 = vadd.f32 0.0, %v519
        %521 = vdwg.mxu0
        %v522 = vadd.f32 %v479, %v517
        %v523 = vadd.f32 %v482, %v520
        %v524 = vperm.slane %v343, 0
        %v525 = vadd.f32 %v522, %v524
        %v526 = vadd.f32 %v523, %v524
        %vm527 = vcmp.ge.f32.partialorder %v525, 0.0
        %vm528 = vcmp.ge.f32.partialorder %v526, 0.0
        %v529 = vmul.f32 %v525, 0.1
        %v530 = vmul.f32 %v526, 0.1
        %v531 = vsel %vm527, %v525, %v529
        %v532 = vsel %vm528, %v526, %v530
        %v533 = vld [vmem:[%s2] sm:$0xff]
        %v534 = vld [vmem:[%s2 + $0x8] sm:$0xff]
        %v535 = vld [vmem:[%s2 + $0x10] sm:$0xff]
        %v536 = vld [vmem:[%s2 + $0x18] sm:$0xff]
        %v537 = vld [vmem:[%s2 + $0x20] sm:$0xff]
        %v538 = vld [vmem:[%s2 + $0x28] sm:$0xff]
        %v539 = vld [vmem:[%s2 + $0x30] sm:$0xff]
        %v540 = vld [vmem:[%s2 + $0x38] sm:$0xff]
        %v541 = vld [vmem:[%s2 + $0x40] sm:$0xff]
        %v542 = vld [vmem:[%s2 + $0x48] sm:$0xff]
        %v543 = vld [vmem:[%s2 + $0x50] sm:$0xff]
        %v544 = vld [vmem:[%s2 + $0x58] sm:$0xff]
        %v545 = vld [vmem:[%s2 + $0x60] sm:$0xff]
        %v546 = vld [vmem:[%s2 + $0x68] sm:$0xff]
        %v547 = vld [vmem:[%s2 + $0x70] sm:$0xff]
        %v548 = vld [vmem:[%s2 + $0x78] sm:$0xff]
        %v549 = vperm.slane %v344, 0
        %550 = vmatpush.msra.mxu0 %v548
        %551 = vmatpush.msra.mxu0 %v547
        %552 = vmatpush.msra.mxu0 %v546
        %553 = vmatpush.msra.mxu0 %v545
        %554 = vmatpush.msra.mxu0 %v544
        %555 = vmatpush.msra.mxu0 %v543
        %556 = vmatpush.msra.mxu0 %v542
        %557 = vmatpush.msra.mxu0 %v541
        %558 = vmatpush.msra.mxu0 %v540
        %559 = vmatpush.msra.mxu0 %v539
        %560 = vmatpush.msra.mxu0 %v538
        %561 = vmatpush.msra.mxu0 %v537
        %562 = vmatpush.msra.mxu0 %v536
        %563 = vmatpush.msra.mxu0 %v535
        %564 = vmatpush.msra.mxu0 %v534
        %565 = vmatpush.msra.mxu0 %v533
        %566 = vmatmul.f32.gmra.mxu0 %v531
        %v567 = vpop.f32.mrf.mxu0
        %v568 = vadd.f32 %v549, %v567
        %569 = vmatmul.f32.gmra.mxu0 %v532
        %v570 = vpop.f32.mrf.mxu0
        %v571 = vadd.f32 %v549, %v570
        %572 = vdwg.mxu0
        %vm573 = vcmp.ge.f32.partialorder %v568, 0.0
        %vm574 = vcmp.ge.f32.partialorder %v571, 0.0
        %v575 = vmul.f32 %v568, 0.1
        %v576 = vmul.f32 %v571, 0.1
        %v577 = vsel %vm573, %v568, %v575
        %v578 = vsel %vm574, %v571, %v576
        %579 = vmatpush.msra.mxu0 0.0
        %580 = vmatpush.msra.mxu0 0.0
        %581 = vmatpush.msra.mxu0 0.0
        %582 = vmatpush.msra.mxu0 0.0
        %583 = vmatpush.msra.mxu0 0.0
        %584 = vmatpush.msra.mxu0 0.0
        %585 = vmatpush.msra.mxu0 0.0
        %586 = vmatpush.msra.mxu0 0.0
        %587 = vmatpush.msra.mxu0 0.0
        %588 = vmatpush.msra.mxu0 0.0
        %589 = vmatpush.msra.mxu0 0.0
        %590 = vmatpush.msra.mxu0 0.0
        %591 = vmatpush.msra.mxu0 0.0
        %592 = vmatpush.msra.mxu0 0.0
        %593 = vmatpush.msra.mxu0 %v578
        %594 = vmatpush.msra.mxu0 %v577
        %595 = vmatmul.f32.gmra.mxu0 %v351
        %v596 = vpop.f32.mrf.mxu0
        %v597 = vadd.f32 0.0, %v596
        %598 = vmatmul.f32.gmra.mxu0 %v354
        %v599 = vpop.f32.mrf.mxu0
        %v600 = vadd.f32 0.0, %v599
        %601 = vdwg.mxu0
        %602 = vmatpush.msra.mxu0 0.0
        %603 = vmatpush.msra.mxu0 0.0
        %604 = vmatpush.msra.mxu0 0.0
        %605 = vmatpush.msra.mxu0 0.0
        %606 = vmatpush.msra.mxu0 0.0
        %607 = vmatpush.msra.mxu0 0.0
        %608 = vmatpush.msra.mxu0 0.0
        %609 = vmatpush.msra.mxu0 0.0
        %610 = vmatpush.msra.mxu0 0.0
        %611 = vmatpush.msra.mxu0 0.0
        %612 = vmatpush.msra.mxu0 0.0
        %613 = vmatpush.msra.mxu0 0.0
        %614 = vmatpush.msra.mxu0 0.0
        %615 = vmatpush.msra.mxu0 0.0
        %616 = vmatpush.msra.mxu0 %v578
        %617 = vmatpush.msra.mxu0 %v577
        %618 = vmatmul.f32.gmra.mxu0 %v380
        %v619 = vpop.f32.mrf.mxu0
        %v620 = vadd.f32 0.0, %v619
        %621 = vmatmul.f32.gmra.mxu0 %v383
        %v622 = vpop.f32.mrf.mxu0
        %v623 = vadd.f32 0.0, %v622
        %624 = vdwg.mxu0
        %v625 = vld [vmem:[%s3] sm:$0xff]
        %v626 = vld [vmem:[%s3 + $0x8] sm:$0xff]
        %v627 = vld [vmem:[%s3 + $0x10] sm:$0xff]
        %v628 = vld [vmem:[%s3 + $0x18] sm:$0xff]
        %v629 = vld [vmem:[%s3 + $0x20] sm:$0xff]
        %v630 = vld [vmem:[%s3 + $0x28] sm:$0xff]
        %v631 = vld [vmem:[%s3 + $0x30] sm:$0xff]
        %v632 = vld [vmem:[%s3 + $0x38] sm:$0xff]
        %v633 = vld [vmem:[%s3 + $0x40] sm:$0xff]
        %v634 = vld [vmem:[%s3 + $0x48] sm:$0xff]
        %v635 = vld [vmem:[%s3 + $0x50] sm:$0xff]
        %v636 = vld [vmem:[%s3 + $0x58] sm:$0xff]
        %v637 = vld [vmem:[%s3 + $0x60] sm:$0xff]
        %v638 = vld [vmem:[%s3 + $0x68] sm:$0xff]
        %v639 = vld [vmem:[%s3 + $0x70] sm:$0xff]
        %v640 = vld [vmem:[%s3 + $0x78] sm:$0xff]
        %s641 = scalar_lea.vmem %s3, 128
        %v642 = vld [vmem:[%s641] sm:$0xff]
        %v643 = vld [vmem:[%s641 + $0x8] sm:$0xff]
        %v644 = vld [vmem:[%s641 + $0x10] sm:$0xff]
        %v645 = vld [vmem:[%s641 + $0x18] sm:$0xff]
        %v646 = vld [vmem:[%s641 + $0x20] sm:$0xff]
        %v647 = vld [vmem:[%s641 + $0x28] sm:$0xff]
        %v648 = vld [vmem:[%s641 + $0x30] sm:$0xff]
        %v649 = vld [vmem:[%s641 + $0x38] sm:$0xff]
        %v650 = vld [vmem:[%s641 + $0x40] sm:$0xff]
        %v651 = vld [vmem:[%s641 + $0x48] sm:$0xff]
        %v652 = vld [vmem:[%s641 + $0x50] sm:$0xff]
        %v653 = vld [vmem:[%s641 + $0x58] sm:$0xff]
        %v654 = vld [vmem:[%s641 + $0x60] sm:$0xff]
        %v655 = vld [vmem:[%s641 + $0x68] sm:$0xff]
        %v656 = vld [vmem:[%s641 + $0x70] sm:$0xff]
        %v657 = vld [vmem:[%s641 + $0x78] sm:$0xff]
        %658 = vmatpush.msra.mxu0 %v657
        %659 = vmatpush.msra.mxu0 %v656
        %660 = vmatpush.msra.mxu0 %v655
        %661 = vmatpush.msra.mxu0 %v654
        %662 = vmatpush.msra.mxu0 %v653
        %663 = vmatpush.msra.mxu0 %v652
        %664 = vmatpush.msra.mxu0 %v651
        %665 = vmatpush.msra.mxu0 %v650
        %666 = vmatpush.msra.mxu0 %v649
        %667 = vmatpush.msra.mxu0 %v648
        %668 = vmatpush.msra.mxu0 %v647
        %669 = vmatpush.msra.mxu0 %v646
        %670 = vmatpush.msra.mxu0 %v645
        %671 = vmatpush.msra.mxu0 %v644
        %672 = vmatpush.msra.mxu0 %v643
        %673 = vmatpush.msra.mxu0 %v642
        %674 = vmatmul.f32.gmra.mxu0 %v577
        %v675 = vpop.f32.mrf.mxu0
        %v676 = vadd.f32 0.0, %v675
        %677 = vmatmul.f32.gmra.mxu0 %v578
        %v678 = vpop.f32.mrf.mxu0
        %v679 = vadd.f32 0.0, %v678
        %680 = vdwg.mxu0
        %681 = vmatpush.msra.mxu0 %v640
        %682 = vmatpush.msra.mxu0 %v639
        %683 = vmatpush.msra.mxu0 %v638
        %684 = vmatpush.msra.mxu0 %v637
        %685 = vmatpush.msra.mxu0 %v636
        %686 = vmatpush.msra.mxu0 %v635
        %687 = vmatpush.msra.mxu0 %v634
        %688 = vmatpush.msra.mxu0 %v633
        %689 = vmatpush.msra.mxu0 %v632
        %690 = vmatpush.msra.mxu0 %v631
        %691 = vmatpush.msra.mxu0 %v630
        %692 = vmatpush.msra.mxu0 %v629
        %693 = vmatpush.msra.mxu0 %v628
        %694 = vmatpush.msra.mxu0 %v627
        %695 = vmatpush.msra.mxu0 %v626
        %696 = vmatpush.msra.mxu0 %v625
        %697 = vmatmul.f32.gmra.mxu0 %v597
        %v698 = vpop.f32.mrf.mxu0
        %v699 = vadd.f32 %v676, %v698
        %700 = vmatmul.f32.gmra.mxu0 %v600
        %v701 = vpop.f32.mrf.mxu0
        %v702 = vadd.f32 %v679, %v701
        %703 = vdwg.mxu0
        %s704 = scalar_lea.vmem %s3, 256
        %v705 = vld [vmem:[%s704] sm:$0xff]
        %v706 = vld [vmem:[%s704 + $0x8] sm:$0xff]
        %v707 = vld [vmem:[%s704 + $0x10] sm:$0xff]
        %v708 = vld [vmem:[%s704 + $0x18] sm:$0xff]
        %v709 = vld [vmem:[%s704 + $0x20] sm:$0xff]
        %v710 = vld [vmem:[%s704 + $0x28] sm:$0xff]
        %v711 = vld [vmem:[%s704 + $0x30] sm:$0xff]
        %v712 = vld [vmem:[%s704 + $0x38] sm:$0xff]
        %v713 = vld [vmem:[%s704 + $0x40] sm:$0xff]
        %v714 = vld [vmem:[%s704 + $0x48] sm:$0xff]
        %v715 = vld [vmem:[%s704 + $0x50] sm:$0xff]
        %v716 = vld [vmem:[%s704 + $0x58] sm:$0xff]
        %v717 = vld [vmem:[%s704 + $0x60] sm:$0xff]
        %v718 = vld [vmem:[%s704 + $0x68] sm:$0xff]
        %v719 = vld [vmem:[%s704 + $0x70] sm:$0xff]
        %v720 = vld [vmem:[%s704 + $0x78] sm:$0xff]
        %721 = vmatpush.msra.mxu0 %v720
        %722 = vmatpush.msra.mxu0 %v719
        %723 = vmatpush.msra.mxu0 %v718
        %724 = vmatpush.msra.mxu0 %v717
        %725 = vmatpush.msra.mxu0 %v716
        %726 = vmatpush.msra.mxu0 %v715
        %727 = vmatpush.msra.mxu0 %v714
        %728 = vmatpush.msra.mxu0 %v713
        %729 = vmatpush.msra.mxu0 %v712
        %730 = vmatpush.msra.mxu0 %v711
        %731 = vmatpush.msra.mxu0 %v710
        %732 = vmatpush.msra.mxu0 %v709
        %733 = vmatpush.msra.mxu0 %v708
        %734 = vmatpush.msra.mxu0 %v707
        %735 = vmatpush.msra.mxu0 %v706
        %736 = vmatpush.msra.mxu0 %v705
        %737 = vmatmul.f32.gmra.mxu0 %v620
        %v738 = vpop.f32.mrf.mxu0
        %v739 = vadd.f32 0.0, %v738
        %740 = vmatmul.f32.gmra.mxu0 %v623
        %v741 = vpop.f32.mrf.mxu0
        %v742 = vadd.f32 0.0, %v741
        %743 = vdwg.mxu0
        %v744 = vadd.f32 %v699, %v739
        %v745 = vadd.f32 %v702, %v742
        %v746 = vperm.slane %v345, 0
        %v747 = vadd.f32 %v744, %v746
        %v748 = vadd.f32 %v745, %v746
        %vm749 = vcmp.ge.f32.partialorder %v747, 0.0
        %vm750 = vcmp.ge.f32.partialorder %v748, 0.0
        %v751 = vmul.f32 %v747, 0.1
        %v752 = vmul.f32 %v748, 0.1
        %v753 = vsel %vm749, %v747, %v751
        %v754 = vsel %vm750, %v748, %v752
        %v755 = vadd.f32 %v336, %v753
        %v756 = vadd.f32 %v337, %v754
        %757 = vmatpush.msra.mxu0 0.0
        %758 = vmatpush.msra.mxu0 0.0
        %759 = vmatpush.msra.mxu0 0.0
        %760 = vmatpush.msra.mxu0 0.0
        %761 = vmatpush.msra.mxu0 0.0
        %762 = vmatpush.msra.mxu0 0.0
        %763 = vmatpush.msra.mxu0 0.0
        %764 = vmatpush.msra.mxu0 0.0
        %765 = vmatpush.msra.mxu0 0.0
        %766 = vmatpush.msra.mxu0 0.0
        %767 = vmatpush.msra.mxu0 0.0
        %768 = vmatpush.msra.mxu0 0.0
        %769 = vmatpush.msra.mxu0 0.0
        %770 = vmatpush.msra.mxu0 0.0
        %771 = vmatpush.msra.mxu0 %v756
        %772 = vmatpush.msra.mxu0 %v755
        %773 = vmatmul.f32.gmra.mxu0 %v351
        %v774 = vpop.f32.mrf.mxu0
        %v775 = vadd.f32 0.0, %v774
        %776 = vmatmul.f32.gmra.mxu0 %v354
        %v777 = vpop.f32.mrf.mxu0
        %v778 = vadd.f32 0.0, %v777
        %779 = vdwg.mxu0
        %780 = vmatpush.msra.mxu0 0.0
        %781 = vmatpush.msra.mxu0 0.0
        %782 = vmatpush.msra.mxu0 0.0
        %783 = vmatpush.msra.mxu0 0.0
        %784 = vmatpush.msra.mxu0 0.0
        %785 = vmatpush.msra.mxu0 0.0
        %786 = vmatpush.msra.mxu0 0.0
        %787 = vmatpush.msra.mxu0 0.0
        %788 = vmatpush.msra.mxu0 0.0
        %789 = vmatpush.msra.mxu0 0.0
        %790 = vmatpush.msra.mxu0 0.0
        %791 = vmatpush.msra.mxu0 0.0
        %792 = vmatpush.msra.mxu0 0.0
        %793 = vmatpush.msra.mxu0 0.0
        %794 = vmatpush.msra.mxu0 %v756
        %795 = vmatpush.msra.mxu0 %v755
        %796 = vmatmul.f32.gmra.mxu0 %v380
        %v797 = vpop.f32.mrf.mxu0
        %v798 = vadd.f32 0.0, %v797
        %799 = vmatmul.f32.gmra.mxu0 %v383
        %v800 = vpop.f32.mrf.mxu0
        %v801 = vadd.f32 0.0, %v800
        %802 = vdwg.mxu0
        %v803 = vld [vmem:[%s4] sm:$0xff]
        %v804 = vld [vmem:[%s4 + $0x8] sm:$0xff]
        %v805 = vld [vmem:[%s4 + $0x10] sm:$0xff]
        %v806 = vld [vmem:[%s4 + $0x18] sm:$0xff]
        %v807 = vld [vmem:[%s4 + $0x20] sm:$0xff]
        %v808 = vld [vmem:[%s4 + $0x28] sm:$0xff]
        %v809 = vld [vmem:[%s4 + $0x30] sm:$0xff]
        %v810 = vld [vmem:[%s4 + $0x38] sm:$0xff]
        %s811 = scalar_lea.vmem %s4, 64
        %v812 = vld [vmem:[%s811] sm:$0xff]
        %v813 = vld [vmem:[%s811 + $0x8] sm:$0xff]
        %v814 = vld [vmem:[%s811 + $0x10] sm:$0xff]
        %v815 = vld [vmem:[%s811 + $0x18] sm:$0xff]
        %v816 = vld [vmem:[%s811 + $0x20] sm:$0xff]
        %v817 = vld [vmem:[%s811 + $0x28] sm:$0xff]
        %v818 = vld [vmem:[%s811 + $0x30] sm:$0xff]
        %v819 = vld [vmem:[%s811 + $0x38] sm:$0xff]
        %v821 = vsel %vm425, %v755, 0
        %v824 = vsel %vm425, %v756, 0
        %826 = vmatpush.msra.mxu0 0.0
        %827 = vmatpush.msra.mxu0 0.0
        %828 = vmatpush.msra.mxu0 0.0
        %829 = vmatpush.msra.mxu0 0.0
        %830 = vmatpush.msra.mxu0 0.0
        %831 = vmatpush.msra.mxu0 0.0
        %832 = vmatpush.msra.mxu0 0.0
        %833 = vmatpush.msra.mxu0 0.0
        %834 = vmatpush.msra.mxu0 %v819
        %835 = vmatpush.msra.mxu0 %v818
        %836 = vmatpush.msra.mxu0 %v817
        %837 = vmatpush.msra.mxu0 %v816
        %838 = vmatpush.msra.mxu0 %v815
        %839 = vmatpush.msra.mxu0 %v814
        %840 = vmatpush.msra.mxu0 %v813
        %841 = vmatpush.msra.mxu0 %v812
        %842 = vmatmul.f32.gmra.mxu0 %v821
        %v843 = vpop.f32.mrf.mxu0
        %v844 = vadd.f32 0.0, %v843
        %845 = vmatmul.f32.gmra.mxu0 %v824
        %v846 = vpop.f32.mrf.mxu0
        %v847 = vadd.f32 0.0, %v846
        %848 = vdwg.mxu0
        %v850 = vsel %vm425, %v775, 0
        %v853 = vsel %vm425, %v778, 0
        %855 = vmatpush.msra.mxu0 0.0
        %856 = vmatpush.msra.mxu0 0.0
        %857 = vmatpush.msra.mxu0 0.0
        %858 = vmatpush.msra.mxu0 0.0
        %859 = vmatpush.msra.mxu0 0.0
        %860 = vmatpush.msra.mxu0 0.0
        %861 = vmatpush.msra.mxu0 0.0
        %862 = vmatpush.msra.mxu0 0.0
        %863 = vmatpush.msra.mxu0 %v810
        %864 = vmatpush.msra.mxu0 %v809
        %865 = vmatpush.msra.mxu0 %v808
        %866 = vmatpush.msra.mxu0 %v807
        %867 = vmatpush.msra.mxu0 %v806
        %868 = vmatpush.msra.mxu0 %v805
        %869 = vmatpush.msra.mxu0 %v804
        %870 = vmatpush.msra.mxu0 %v803
        %871 = vmatmul.f32.gmra.mxu0 %v850
        %v872 = vpop.f32.mrf.mxu0
        %v873 = vadd.f32 %v844, %v872
        %874 = vmatmul.f32.gmra.mxu0 %v853
        %v875 = vpop.f32.mrf.mxu0
        %v876 = vadd.f32 %v847, %v875
        %877 = vdwg.mxu0
        %s878 = scalar_lea.vmem %s4, 128
        %v879 = vld [vmem:[%s878] sm:$0xff]
        %v880 = vld [vmem:[%s878 + $0x8] sm:$0xff]
        %v881 = vld [vmem:[%s878 + $0x10] sm:$0xff]
        %v882 = vld [vmem:[%s878 + $0x18] sm:$0xff]
        %v883 = vld [vmem:[%s878 + $0x20] sm:$0xff]
        %v884 = vld [vmem:[%s878 + $0x28] sm:$0xff]
        %v885 = vld [vmem:[%s878 + $0x30] sm:$0xff]
        %v886 = vld [vmem:[%s878 + $0x38] sm:$0xff]
        %v888 = vsel %vm425, %v798, 0
        %v891 = vsel %vm425, %v801, 0
        %893 = vmatpush.msra.mxu0 0.0
        %894 = vmatpush.msra.mxu0 0.0
        %895 = vmatpush.msra.mxu0 0.0
        %896 = vmatpush.msra.mxu0 0.0
        %897 = vmatpush.msra.mxu0 0.0
        %898 = vmatpush.msra.mxu0 0.0
        %899 = vmatpush.msra.mxu0 0.0
        %900 = vmatpush.msra.mxu0 0.0
        %901 = vmatpush.msra.mxu0 %v886
        %902 = vmatpush.msra.mxu0 %v885
        %903 = vmatpush.msra.mxu0 %v884
        %904 = vmatpush.msra.mxu0 %v883
        %905 = vmatpush.msra.mxu0 %v882
        %906 = vmatpush.msra.mxu0 %v881
        %907 = vmatpush.msra.mxu0 %v880
        %908 = vmatpush.msra.mxu0 %v879
        %909 = vmatmul.f32.gmra.mxu0 %v888
        %v910 = vpop.f32.mrf.mxu0
        %v911 = vadd.f32 0.0, %v910
        %912 = vmatmul.f32.gmra.mxu0 %v891
        %v913 = vpop.f32.mrf.mxu0
        %v914 = vadd.f32 0.0, %v913
        %915 = vdwg.mxu0
        %v916 = vadd.f32 %v873, %v911
        %v917 = vadd.f32 %v876, %v914
        %v918 = vperm.slane %v346, 0
        %v919 = vadd.f32 %v916, %v918
        %v920 = vadd.f32 %v917, %v918
        %vm921 = vcmp.ge.f32.partialorder %v919, 0.0
        %vm922 = vcmp.ge.f32.partialorder %v920, 0.0
        %v923 = vmul.f32 %v919, 0.1
        %v924 = vmul.f32 %v920, 0.1
        %v925 = vsel %vm921, %v919, %v923
        %v926 = vsel %vm922, %v920, %v924
        %v927 = vld [vmem:[#allocation5] sm:$0xff]
        %v928 = vld [vmem:[#allocation5 + $0x8] sm:$0xff]
        %v929 = vld [vmem:[#allocation5 + $0x10] sm:$0xff]
        %v930 = vld [vmem:[#allocation5 + $0x18] sm:$0xff]
        %v931 = vld [vmem:[#allocation5 + $0x20] sm:$0xff]
        %v932 = vld [vmem:[#allocation5 + $0x28] sm:$0xff]
        %v933 = vld [vmem:[#allocation5 + $0x30] sm:$0xff]
        %v934 = vld [vmem:[#allocation5 + $0x38] sm:$0xff]
        %v935 = vld [vmem:[#allocation5 + $0x40] sm:$0xff]
        %v936 = vld [vmem:[#allocation5 + $0x48] sm:$0xff]
        %v937 = vld [vmem:[#allocation5 + $0x50] sm:$0xff]
        %v938 = vld [vmem:[#allocation5 + $0x58] sm:$0xff]
        %v939 = vld [vmem:[#allocation5 + $0x60] sm:$0xff]
        %v940 = vld [vmem:[#allocation5 + $0x68] sm:$0xff]
        %v941 = vld [vmem:[#allocation5 + $0x70] sm:$0xff]
        %v942 = vld [vmem:[#allocation5 + $0x78] sm:$0xff]
        %943 = vmatpush.msra.mxu0 %v942
        %944 = vmatpush.msra.mxu0 %v941
        %945 = vmatpush.msra.mxu0 %v940
        %946 = vmatpush.msra.mxu0 %v939
        %947 = vmatpush.msra.mxu0 %v938
        %948 = vmatpush.msra.mxu0 %v937
        %949 = vmatpush.msra.mxu0 %v936
        %950 = vmatpush.msra.mxu0 %v935
        %951 = vmatpush.msra.mxu0 %v934
        %952 = vmatpush.msra.mxu0 %v933
        %953 = vmatpush.msra.mxu0 %v932
        %954 = vmatpush.msra.mxu0 %v931
        %955 = vmatpush.msra.mxu0 %v930
        %956 = vmatpush.msra.mxu0 %v929
        %957 = vmatpush.msra.mxu0 %v928
        %958 = vmatpush.msra.mxu0 %v927
        %959 = vmatmul.f32.gmra.mxu0 %v925
        %v960 = vpop.f32.mrf.mxu0
        %v961 = vadd.f32 0.0, %v960
        %962 = vmatmul.f32.gmra.mxu0 %v926
        %v963 = vpop.f32.mrf.mxu0
        %v964 = vadd.f32 0.0, %v963
        %965 = vdwg.mxu0
        %v966 = vsub.f32 %v925, %v961
        %v967 = vsub.f32 %v926, %v964
        %v968 = vmul.f32 %v966, %v966
        %v969 = vmul.f32 %v967, %v967
        %970 = vmatpush.msra.mxu0 %v942
        %971 = vmatpush.msra.mxu0 %v941
        %972 = vmatpush.msra.mxu0 %v940
        %973 = vmatpush.msra.mxu0 %v939
        %974 = vmatpush.msra.mxu0 %v938
        %975 = vmatpush.msra.mxu0 %v937
        %976 = vmatpush.msra.mxu0 %v936
        %977 = vmatpush.msra.mxu0 %v935
        %978 = vmatpush.msra.mxu0 %v934
        %979 = vmatpush.msra.mxu0 %v933
        %980 = vmatpush.msra.mxu0 %v932
        %981 = vmatpush.msra.mxu0 %v931
        %982 = vmatpush.msra.mxu0 %v930
        %983 = vmatpush.msra.mxu0 %v929
        %984 = vmatpush.msra.mxu0 %v928
        %985 = vmatpush.msra.mxu0 %v927
        %986 = vmatmul.f32.gmra.mxu0 %v968
        %v987 = vpop.f32.mrf.mxu0
        %v988 = vadd.f32 1e-05, %v987
        %989 = vmatmul.f32.gmra.mxu0 %v969
        %v990 = vpop.f32.mrf.mxu0
        %v991 = vadd.f32 1e-05, %v990
        %992 = vdwg.mxu0
        %v993 = vrsqrt.pop %v988
        %v994 = vmul.f32 %v993, %v988
        %v995 = vmul.f32 %v994, %v993
        %v996 = vmul.f32 0.5, %v995
        %v997 = vsub.f32 1.5, %v996
        %v998 = vmul.f32 %v993, %v997
        %vm999 = vweird.f32 %v988
        %vm1000 = vweird.f32 %v993
        %vm1001 = vmor %vm999, %vm1000
        %v1002 = vsel %vm1001, %v993, %v998
        %v1003 = vrsqrt.pop %v991
        %v1004 = vmul.f32 %v1003, %v991
        %v1005 = vmul.f32 %v1004, %v1003
        %v1006 = vmul.f32 0.5, %v1005
        %v1007 = vsub.f32 1.5, %v1006
        %v1008 = vmul.f32 %v1003, %v1007
        %vm1009 = vweird.f32 %v991
        %vm1010 = vweird.f32 %v1003
        %vm1011 = vmor %vm1009, %vm1010
        %v1012 = vsel %vm1011, %v1003, %v1008
        %v1013 = vmul.f32 %v966, %v1002
        %v1014 = vmul.f32 %v967, %v1012
        %v1015 = vperm.slane %v347, 0
        %v1016 = vmul.f32 %v1013, %v1015
        %v1017 = vmul.f32 %v1014, %v1015
        %v1018 = vperm.slane %v348, 0
        %v1019 = vadd.f32 %v1016, %v1018
        %v1020 = vadd.f32 %v1017, %v1018
        %1021 = vst [vmem:[%s330] sm:$0xff] %v1019
        %1022 = vst [vmem:[%s330 + $0x8] sm:$0xff] %v1020
        %s1023 = sand.u32 %s205, 1
        %s1024 = scalar_lea.sflag [#allocation4], %s1023
        %s1025 = sand.u32 %s205, 1
        %s1026 = smul.addr %s1025, 16
        %s1027 = scalar_lea.vmem [#allocation7], %s1026
        // Predicated region
        $region61: #{tpu_custom_call.1} parent=51 // pred_check
          %p1028 = pneg %p215
        $region62: #{tpu_custom_call.1} parent=51 // pred_check_branch
          %1030 = sbr.rel (%p1028) target = $region64
        $region63: #{tpu_custom_call.1} parent=51 // pred_region
          %1032 = vsyncadd %s1024, 0
          %s1033 = smul.addr %s24, 2
          %s1034 = smul.addr %s1033, 8
          %s1035 = scalar_lea.hbm %s8, %s1034
          %s1036 = sshll.u32 %s1027, 4
          %s1037 = int_to_ptr.vmem [resolvable:$true] %s1036
          %s1038 = sshll.u32 %s1035, 4
          %s1039 = int_to_ptr.hbm [resolvable:$true] %s1038
          %1044 = dma.vmem_to_hbm [thread:$0]  %s1037, 256, %s1039, %s1024, 128, 128, 8
        $region64: #{tpu_custom_call.1} parent=51 // pred_fallthru
          _
      $region52: #{tpu_custom_call.1} parent=5 // pred_fallthru
        _
      %p1045 = scmp.le.s32.totalorder 2, %s19
      // Predicated region
      $region65: #{tpu_custom_call.1} parent=5 // pred_check
        %p1046 = pneg %p1045
      $region66: #{tpu_custom_call.1} parent=5 // pred_check_branch
        %1048 = sbr.rel (%p1046) target = $region68
      $region67: #{tpu_custom_call.1} parent=5 // pred_region
        %s1049 = ssub.s32 %s19, 2
        // Predicated region
        $region69: #{tpu_custom_call.1} parent=67 // pred_check
          %p1050 = pneg %p221
        $region70: #{tpu_custom_call.1} parent=67 // pred_check_branch
          %1052 = sbr.rel (%p1050) target = $region72
        $region71: #{tpu_custom_call.1} parent=67 // pred_region
          %s1053 = sand.u32 %s206, 1
          %s1054 = scalar_lea.sflag [#allocation4], %s1053
          %s1055 = sand.u32 %s206, 1
          %s1056 = smul.addr %s1055, 16
          %s1057 = scalar_lea.vmem [#allocation7], %s1056
          %1059 = dma.done %s1054, 256
        $region72: #{tpu_custom_call.1} parent=67 // pred_fallthru
          _
      $region68: #{tpu_custom_call.1} parent=5 // pred_fallthru
        _
    $region6: #{tpu_custom_call.1} parent=1 // loop_footer
      %s23 = sadd.s32 1, %s19
    $region7: #{tpu_custom_call.1} parent=1 // loop_footer_branch
      %18 = sbr.rel target = $region3
    $region8: #{tpu_custom_call.1} parent=1 // loop_exit
      _
    %1060 = vsyncpa [#allocation3], 1
    %s1061 = scalar_lea.sflag [#allocation3], 1
    %1062 = vsyncpa %s1061, 1
    %1063 = vsyncpa [#allocation6], 1
    %1064 = vsyncpa [#allocation4], 1
    %s1065 = scalar_lea.sflag [#allocation4], 1
    %1066 = vsyncpa %s1065, 1

</llo_original>
